<compile_context>
chip_gen: v6e
topology: v6e:2x2x1
jax: 0.10.0
libtpu: 0.0.40
codegen_flags: <defaults>
</compile_context>

<pallas_src>
import functools

import jax
import jax.numpy as jnp
from jax import lax
from jax.experimental import pallas as pl
from jax.experimental.pallas import tpu as pltpu


def _round_up(x, m):
    return ((x + m - 1) // m) * m


def _linear_kernel_single_k(x_ref, w_ref, b_ref, o_ref, *, compute_dtype):
    # Whole K fits in one tile: no accumulator, write output directly.
    # x_ref: (tm, tk) f32   w_ref: (tn, tk) compute_dtype   b_ref: (1, tn) f32
    x = x_ref[...].astype(compute_dtype)          # in-kernel cast (VPU, free)
    acc = lax.dot_general(
        x, w_ref[...],
        dimension_numbers=(((1,), (1,)), ((), ())),   # contract on K (lane dim)
        preferred_element_type=jnp.float32,
    )
    o_ref[...] = (acc + b_ref[...]).astype(o_ref.dtype)


def _linear_kernel_multi_k(x_ref, w_ref, b_ref, o_ref, acc_ref, *, compute_dtype):
    # K-reduction with an f32 VMEM accumulator resident across the K grid axis.
    k = pl.program_id(2)

    @pl.when(k == 0)
    def _init():
        acc_ref[...] = jnp.zeros_like(acc_ref)

    x = x_ref[...].astype(compute_dtype)          # in-kernel cast (VPU, free)
    acc_ref[...] += lax.dot_general(
        x, w_ref[...],
        dimension_numbers=(((1,), (1,)), ((), ())),
        preferred_element_type=jnp.float32,
    )

    @pl.when(k == pl.num_programs(2) - 1)
    def _finalize():
        # Bias added exactly once, in the epilogue.
        o_ref[...] = (acc_ref[...] + b_ref[...]).astype(o_ref.dtype)


@functools.partial(jax.jit, static_argnames=("use_bf16",))
def linear_model_forward(x_nchw, weight, bias, *, use_bf16=True):
    """Forward pass of LinearModel.

    x_nchw : (B, C, H, W) float32
    weight : (num_classes, D) float32   (PyTorch nn.Linear layout, D = C*H*W)
    bias   : (num_classes,)   float32
    returns: (B, num_classes) float32
    """
    B = x_nchw.shape[0]
    x2d = x_nchw.reshape(B, -1)            # X.view(X.shape[0], -1)
    D = x2d.shape[1]
    C = weight.shape[0]                    # num_classes

    compute_dtype = jnp.bfloat16 if use_bf16 else jnp.float32
    w_itemsize = jnp.dtype(compute_dtype).itemsize

    # ---- tile sizes (re-derived from shapes each call) ---------------------
    N_pad = _round_up(C, 128)              # lane-dense output slab
    tn = min(N_pad, 256)
    N_pad = _round_up(N_pad, tn)

    D_pad = _round_up(D, 128)
    tk = min(D_pad, 2048)                  # big K chunk: K axis often collapses to 1
    D_pad = _round_up(D_pad, tk)

    M_pad = _round_up(B, 8)                # sublane multiple
    tm = min(M_pad, 512)
    # v7x: if both "parallel" axes would have extent 1, split M across the two
    # TensorCores when there is enough batch to make it worthwhile.
    if M_pad // tm == 1 and N_pad // tn == 1 and M_pad >= 16:
        tm = _round_up((M_pad + 1) // 2, 8)
    M_pad = _round_up(M_pad, tm)

    m_blocks = M_pad // tm
    n_blocks = N_pad // tn
    k_blocks = D_pad // tk

    # ---- prepare operands ---------------------------------------------------
    # x stays f32 in HBM; cast to bf16 happens inside the kernel on the VMEM
    # tile.  Skip the pad copy entirely when already aligned.
    if M_pad != B or D_pad != D:
        x_p = jnp.pad(x2d, ((0, M_pad - B), (0, D_pad - D)))
    else:
        x_p = x2d
    # Weight/bias are small (classifier head): one-time cast/pad in the wrapper.
    w_p = jnp.pad(weight.astype(compute_dtype), ((0, N_pad - C), (0, D_pad - D)))
    b_p = jnp.pad(bias.astype(jnp.float32), (0, N_pad - C)).reshape(1, N_pad)

    cost = pl.CostEstimate(
        flops=2 * M_pad * N_pad * D_pad,
        transcendentals=0,
        bytes_accessed=(4 * n_blocks * M_pad * D_pad          # f32 x (per N block)
                        + w_itemsize * m_blocks * N_pad * D_pad  # weight (per M block)
                        + 4 * (M_pad * N_pad + N_pad)),          # out + bias
    )

    if k_blocks == 1:
        # Single K chunk: no accumulator, 2-D grid, direct output write.
        kernel = functools.partial(_linear_kernel_single_k,
                                   compute_dtype=compute_dtype)
        grid = (m_blocks, n_blocks)
        in_specs = [
            pl.BlockSpec((tm, tk), lambda i, j: (i, 0)),   # activations (f32)
            pl.BlockSpec((tn, tk), lambda i, j: (j, 0)),   # weight (C, D) layout
            pl.BlockSpec((1, tn), lambda i, j: (0, j)),    # bias row
        ]
        out_specs = pl.BlockSpec((tm, tn), lambda i, j: (i, j))
        scratch_shapes = []
        dim_sem = ("parallel", "parallel")
    else:
        kernel = functools.partial(_linear_kernel_multi_k,
                                   compute_dtype=compute_dtype)
        grid = (m_blocks, n_blocks, k_blocks)
        in_specs = [
            pl.BlockSpec((tm, tk), lambda i, j, k: (i, k)),   # activations (f32)
            pl.BlockSpec((tn, tk), lambda i, j, k: (j, k)),   # weight (C, D)
            pl.BlockSpec((1, tn), lambda i, j, k: (0, j)),    # bias row
        ]
        out_specs = pl.BlockSpec((tm, tn), lambda i, j, k: (i, j))
        scratch_shapes = [pltpu.VMEM((tm, tn), jnp.float32)]
        dim_sem = ("parallel", "parallel", "arbitrary")

    out_p = pl.pallas_call(
        kernel,
        out_shape=jax.ShapeDtypeStruct((M_pad, N_pad), jnp.float32),
        grid=grid,
        in_specs=in_specs,
        out_specs=out_specs,
        scratch_shapes=scratch_shapes,
        compiler_params=pltpu.CompilerParams(
            dimension_semantics=dim_sem,
            # Safe on all generations (v7x has 64 MiB physical VMEM).
            vmem_limit_bytes=32 * 1024 * 1024,
        ),
        cost_estimate=cost,
    )(x_p, w_p, b_p)

    # Slice the padding back off.
    return out_p[:B, :C]


if __name__ == "__main__":
    key = jax.random.PRNGKey(0)
    kx, kw, kb = jax.random.split(key, 3)

    # Small shapes consistent with the module: X is (B, C, H, W) -> flatten.
    B, Cch, H, W = 2, 4, 16, 16
    input_size = Cch * H * W        # 1024
    num_classes = 10

    x = jax.random.normal(kx, (B, Cch, H, W), dtype=jnp.float32)

    # Deterministic init (mimics nn.Linear's uniform(-1/sqrt(D), 1/sqrt(D))).
    bound = 1.0 / (input_size ** 0.5)
    weight = jax.random.uniform(kw, (num_classes, input_size),
                                minval=-bound, maxval=bound, dtype=jnp.float32)
    bias = jax.random.uniform(kb, (num_classes,),
                              minval=-bound, maxval=bound, dtype=jnp.float32)

    out = linear_model_forward(x, weight, bias)
    out = jax.block_until_ready(out)

    # Reference in plain JAX (f32).  Kernel uses bf16 MXU operands + f32
    # accumulation, so tolerance is sized for bf16 inputs.
    ref = x.reshape(B, -1) @ weight.T + bias
    assert out.shape == (B, num_classes)
    assert jnp.allclose(out, ref, atol=5e-2, rtol=5e-2), (
        float(jnp.max(jnp.abs(out - ref))))

    print("KERNEL_OK")
</pallas_src>

<mosaic_0001>
module attributes {stable_mosaic.version = 11 : i64} {
  func.func @_linear_kernel_single_k(%arg0: i32, %arg1: i32, %arg2: memref<8x1024xf32, #tpu.memory_space<vmem>>, %arg3: memref<128x1024xbf16, #tpu.memory_space<vmem>>, %arg4: memref<1x128xf32, #tpu.memory_space<vmem>>, %arg5: memref<8x128xf32, #tpu.memory_space<vmem>>) attributes {dimension_semantics = [#tpu.dimension_semantics<parallel>, #tpu.dimension_semantics<parallel>], iteration_bounds = array<i64: 1, 1>, scalar_prefetch = 0 : i64, scratch_operands = 0 : i64, tpu.core_type = #tpu.core_type<tc>, window_params = [{transform_indices = @transform_0, window_bounds = array<i64: 8, 1024>}, {transform_indices = @transform_1, window_bounds = array<i64: 128, 1024>}, {transform_indices = @transform_2, window_bounds = array<i64: 1, 128>}, {transform_indices = @transform_3, window_bounds = array<i64: 8, 128>}]} {
    %c0 = arith.constant 0 : index
    %c0_0 = arith.constant 0 : index
    %0 = vector.load %arg2[%c0, %c0_0] : memref<8x1024xf32, #tpu.memory_space<vmem>>, vector<8x1024xf32>
    %1 = arith.truncf %0 : vector<8x1024xf32> to vector<8x1024xbf16>
    %c0_1 = arith.constant 0 : index
    %c0_2 = arith.constant 0 : index
    %2 = vector.load %arg3[%c0_1, %c0_2] : memref<128x1024xbf16, #tpu.memory_space<vmem>>, vector<128x1024xbf16>
    %cst = arith.constant dense<0.000000e+00> : vector<8x128xf32>
    %3 = tpu.matmul %1, %2, %cst {dimension_numbers = #tpu.dot_dimension_numbers<[1], [1], [0], [0], [0, 0, 1, 0], [], []>} : vector<8x1024xbf16>, vector<128x1024xbf16>, vector<8x128xf32> -> vector<8x128xf32>
    %c0_3 = arith.constant 0 : index
    %c0_4 = arith.constant 0 : index
    %4 = vector.load %arg4[%c0_3, %c0_4] : memref<1x128xf32, #tpu.memory_space<vmem>>, vector<1x128xf32>
    %5 = vector.broadcast %4 : vector<1x128xf32> to vector<8x128xf32>
    %6 = arith.addf %3, %5 : vector<8x128xf32>
    %c0_5 = arith.constant 0 : index
    %c0_6 = arith.constant 0 : index
    %7 = vector.load %arg5[%c0_5, %c0_6] : memref<8x128xf32, #tpu.memory_space<vmem>>, vector<8x128xf32>
    tpu.vector_store %arg5[%c0_5, %c0_6], %6 {strides = array<i32>} : memref<8x128xf32, #tpu.memory_space<vmem>>, vector<8x128xf32>,
    return
  }
  func.func @transform_0(%arg0: i32, %arg1: i32) -> (i32, i32) {
    %c0_i32 = arith.constant 0 : i32
    %c0_i32_0 = arith.constant 0 : i32
    return %arg0, %c0_i32 : i32, i32
  }
  func.func @transform_1(%arg0: i32, %arg1: i32) -> (i32, i32) {
    %c0_i32 = arith.constant 0 : i32
    %c0_i32_0 = arith.constant 0 : i32
    return %arg1, %c0_i32 : i32, i32
  }
  func.func @transform_2(%arg0: i32, %arg1: i32) -> (i32, i32) {
    %c0_i32 = arith.constant 0 : i32
    %c0_i32_0 = arith.constant 0 : i32
    return %c0_i32, %arg1 : i32, i32
  }
  func.func @transform_3(%arg0: i32, %arg1: i32) -> (i32, i32) {
    %c0_i32 = arith.constant 0 : i32
    return %arg0, %arg1 : i32, i32
  }
}

</mosaic_0001>

<llo_original>
// kernel: linear_model_forward.1
$region0: #{linear_model_forward.1}
  #allocation0 [shape = 'u32[]', space=smem, size = 0x4, offset = 0x4, fixed_abs, tag = 'smem constant byte address 0x4 - core index']
  #allocation1 [shape = 'u32[144,128]{1,0:T(1,128)}', space=vmem, size = 0x12000, scoped, tag = 'internal scratch']
  %s0 = inlined_call_operand.vmem [shape: f32[8,1024], index: 0, kind: input, shape index: {}]
  %s1 = inlined_call_operand.vmem [shape: bf16[128,1024], index: 1, kind: input, shape index: {}]
  %s2 = inlined_call_operand.vmem [shape: f32[1,128], index: 2, kind: input, shape index: {}]
  %s3 = inlined_call_operand.vmem [shape: f32[8,128], index: 3, kind: output, shape index: {}]
  %s4 = sld [smem:[#allocation0]]
  $region22: #{linear_model_forward.1} parent=0
    _
  %s6 = ssub.s32 1, %s4
  %s7 = scalar_select 0, %s6, %s4
  // Predicated region
  $region2: #{linear_model_forward.1} parent=0 // pred_check
    _
  $region3: #{linear_model_forward.1} parent=0 // pred_check_branch
    %9 = sbr.rel (0) target = $region5
  $region4: #{linear_model_forward.1} parent=0 // pred_region
    _
  $region5: #{linear_model_forward.1} parent=0 // pred_fallthru
    _
  // Predicated region
  $region6: #{linear_model_forward.1} parent=0 // pred_check
    _
  $region7: #{linear_model_forward.1} parent=0 // pred_check_branch
    %11 = sbr.rel (0) target = $region9
  $region8: #{linear_model_forward.1} parent=0 // pred_region
    _
  $region9: #{linear_model_forward.1} parent=0 // pred_fallthru
    _
  // Predicated region
  $region10: #{linear_model_forward.1} parent=0 // pred_check
    _
  $region11: #{linear_model_forward.1} parent=0 // pred_check_branch
    %13 = sbr.rel (0) target = $region13
  $region12: #{linear_model_forward.1} parent=0 // pred_region
    _
  $region13: #{linear_model_forward.1} parent=0 // pred_fallthru
    _
  %v15 = vld [vmem:[%s0] sm:$0xff]
  %v16 = vld [vmem:[%s0 + $0x8] sm:$0xff]
  %v17 = vld [vmem:[%s0 + $0x10] sm:$0xff]
  %v18 = vld [vmem:[%s0 + $0x18] sm:$0xff]
  %v19 = vld [vmem:[%s0 + $0x20] sm:$0xff]
  %v20 = vld [vmem:[%s0 + $0x28] sm:$0xff]
  %v21 = vld [vmem:[%s0 + $0x30] sm:$0xff]
  %v22 = vld [vmem:[%s0 + $0x38] sm:$0xff]
  %v23 = vpack.c.bf16 %v15, %v15
  %v24 = vpack.c.bf16 %v16, %v16
  %v25 = vpack.c.bf16 %v17, %v17
  %v26 = vpack.c.bf16 %v18, %v18
  %v27 = vpack.c.bf16 %v19, %v19
  %v28 = vpack.c.bf16 %v20, %v20
  %v29 = vpack.c.bf16 %v21, %v21
  %v30 = vpack.c.bf16 %v22, %v22
  %v31 = vld [vmem:[%s1] sm:$0xff]
  %v32 = vld [vmem:[%s1 + $0x8] sm:$0xff]
  %v33 = vld [vmem:[%s1 + $0x10] sm:$0xff]
  %v34 = vld [vmem:[%s1 + $0x18] sm:$0xff]
  %v35 = vld [vmem:[%s1 + $0x20] sm:$0xff]
  %v36 = vld [vmem:[%s1 + $0x28] sm:$0xff]
  %v37 = vld [vmem:[%s1 + $0x30] sm:$0xff]
  %v38 = vld [vmem:[%s1 + $0x38] sm:$0xff]
  %v39 = vld [vmem:[%s1 + $0x40] sm:$0xff]
  %v40 = vld [vmem:[%s1 + $0x48] sm:$0xff]
  %v41 = vld [vmem:[%s1 + $0x50] sm:$0xff]
  %v42 = vld [vmem:[%s1 + $0x58] sm:$0xff]
  %v43 = vld [vmem:[%s1 + $0x60] sm:$0xff]
  %v44 = vld [vmem:[%s1 + $0x68] sm:$0xff]
  %v45 = vld [vmem:[%s1 + $0x70] sm:$0xff]
  %v46 = vld [vmem:[%s1 + $0x78] sm:$0xff]
  %v47 = vld [vmem:[%s1 + $0x80] sm:$0xff]
  %v48 = vld [vmem:[%s1 + $0x88] sm:$0xff]
  %v49 = vld [vmem:[%s1 + $0x90] sm:$0xff]
  %v50 = vld [vmem:[%s1 + $0x98] sm:$0xff]
  %v51 = vld [vmem:[%s1 + $0xa0] sm:$0xff]
  %v52 = vld [vmem:[%s1 + $0xa8] sm:$0xff]
  %v53 = vld [vmem:[%s1 + $0xb0] sm:$0xff]
  %v54 = vld [vmem:[%s1 + $0xb8] sm:$0xff]
  %v55 = vld [vmem:[%s1 + $0xc0] sm:$0xff]
  %v56 = vld [vmem:[%s1 + $0xc8] sm:$0xff]
  %v57 = vld [vmem:[%s1 + $0xd0] sm:$0xff]
  %v58 = vld [vmem:[%s1 + $0xd8] sm:$0xff]
  %v59 = vld [vmem:[%s1 + $0xe0] sm:$0xff]
  %v60 = vld [vmem:[%s1 + $0xe8] sm:$0xff]
  %v61 = vld [vmem:[%s1 + $0xf0] sm:$0xff]
  %v62 = vld [vmem:[%s1 + $0xf8] sm:$0xff]
  %v63 = vld [vmem:[%s1 + $0x100] sm:$0xff]
  %v64 = vld [vmem:[%s1 + $0x108] sm:$0xff]
  %v65 = vld [vmem:[%s1 + $0x110] sm:$0xff]
  %v66 = vld [vmem:[%s1 + $0x118] sm:$0xff]
  %v67 = vld [vmem:[%s1 + $0x120] sm:$0xff]
  %v68 = vld [vmem:[%s1 + $0x128] sm:$0xff]
  %v69 = vld [vmem:[%s1 + $0x130] sm:$0xff]
  %v70 = vld [vmem:[%s1 + $0x138] sm:$0xff]
  %v71 = vld [vmem:[%s1 + $0x140] sm:$0xff]
  %v72 = vld [vmem:[%s1 + $0x148] sm:$0xff]
  %v73 = vld [vmem:[%s1 + $0x150] sm:$0xff]
  %v74 = vld [vmem:[%s1 + $0x158] sm:$0xff]
  %v75 = vld [vmem:[%s1 + $0x160] sm:$0xff]
  %v76 = vld [vmem:[%s1 + $0x168] sm:$0xff]
  %v77 = vld [vmem:[%s1 + $0x170] sm:$0xff]
  %v78 = vld [vmem:[%s1 + $0x178] sm:$0xff]
  %v79 = vld [vmem:[%s1 + $0x180] sm:$0xff]
  %v80 = vld [vmem:[%s1 + $0x188] sm:$0xff]
  %v81 = vld [vmem:[%s1 + $0x190] sm:$0xff]
  %v82 = vld [vmem:[%s1 + $0x198] sm:$0xff]
  %v83 = vld [vmem:[%s1 + $0x1a0] sm:$0xff]
  %v84 = vld [vmem:[%s1 + $0x1a8] sm:$0xff]
  %v85 = vld [vmem:[%s1 + $0x1b0] sm:$0xff]
  %v86 = vld [vmem:[%s1 + $0x1b8] sm:$0xff]
  %v87 = vld [vmem:[%s1 + $0x1c0] sm:$0xff]
  %v88 = vld [vmem:[%s1 + $0x1c8] sm:$0xff]
  %v89 = vld [vmem:[%s1 + $0x1d0] sm:$0xff]
  %v90 = vld [vmem:[%s1 + $0x1d8] sm:$0xff]
  %v91 = vld [vmem:[%s1 + $0x1e0] sm:$0xff]
  %v92 = vld [vmem:[%s1 + $0x1e8] sm:$0xff]
  %v93 = vld [vmem:[%s1 + $0x1f0] sm:$0xff]
  %v94 = vld [vmem:[%s1 + $0x1f8] sm:$0xff]
  %v95 = vld [vmem:[%s2] sm:$0x1]
  %v97 = vlaneseq
  %v98 = vshrl.u32 %v97, 7
  %v99 = vsub.s32 0, %v98
  %v100 = vrot.slane %v95, %v99
  %v166 = vunpack.c.l.b16 %v31
  %v167 = vunpack.c.h.b16 %v31
  %v168 = vunpack.c.l.b16 %v32
  %v169 = vunpack.c.h.b16 %v32
  %v170 = vunpack.c.l.b16 %v33
  %v171 = vunpack.c.h.b16 %v33
  %v172 = vunpack.c.l.b16 %v34
  %v173 = vunpack.c.h.b16 %v34
  %v174 = vunpack.c.l.b16 %v35
  %v175 = vunpack.c.h.b16 %v35
  %v176 = vunpack.c.l.b16 %v36
  %v177 = vunpack.c.h.b16 %v36
  %v178 = vunpack.c.l.b16 %v37
  %v179 = vunpack.c.h.b16 %v37
  %v180 = vunpack.c.l.b16 %v38
  %v181 = vunpack.c.h.b16 %v38
  %v182 = vunpack.c.l.b16 %v39
  %v183 = vunpack.c.h.b16 %v39
  %v184 = vunpack.c.l.b16 %v40
  %v185 = vunpack.c.h.b16 %v40
  %v186 = vunpack.c.l.b16 %v41
  %v187 = vunpack.c.h.b16 %v41
  %v188 = vunpack.c.l.b16 %v42
  %v189 = vunpack.c.h.b16 %v42
  %v190 = vunpack.c.l.b16 %v43
  %v191 = vunpack.c.h.b16 %v43
  %v192 = vunpack.c.l.b16 %v44
  %v193 = vunpack.c.h.b16 %v44
  %v194 = vunpack.c.l.b16 %v45
  %v195 = vunpack.c.h.b16 %v45
  %v196 = vunpack.c.l.b16 %v46
  %v197 = vunpack.c.h.b16 %v46
  %v198 = vunpack.c.l.b16 %v47
  %v199 = vunpack.c.h.b16 %v47
  %v200 = vunpack.c.l.b16 %v48
  %v201 = vunpack.c.h.b16 %v48
  %v202 = vunpack.c.l.b16 %v49
  %v203 = vunpack.c.h.b16 %v49
  %v204 = vunpack.c.l.b16 %v50
  %v205 = vunpack.c.h.b16 %v50
  %v206 = vunpack.c.l.b16 %v51
  %v207 = vunpack.c.h.b16 %v51
  %v208 = vunpack.c.l.b16 %v52
  %v209 = vunpack.c.h.b16 %v52
  %v210 = vunpack.c.l.b16 %v53
  %v211 = vunpack.c.h.b16 %v53
  %v212 = vunpack.c.l.b16 %v54
  %v213 = vunpack.c.h.b16 %v54
  %v214 = vunpack.c.l.b16 %v55
  %v215 = vunpack.c.h.b16 %v55
  %v216 = vunpack.c.l.b16 %v56
  %v217 = vunpack.c.h.b16 %v56
  %v218 = vunpack.c.l.b16 %v57
  %v219 = vunpack.c.h.b16 %v57
  %v220 = vunpack.c.l.b16 %v58
  %v221 = vunpack.c.h.b16 %v58
  %v222 = vunpack.c.l.b16 %v59
  %v223 = vunpack.c.h.b16 %v59
  %v224 = vunpack.c.l.b16 %v60
  %v225 = vunpack.c.h.b16 %v60
  %v226 = vunpack.c.l.b16 %v61
  %v227 = vunpack.c.h.b16 %v61
  %v228 = vunpack.c.l.b16 %v62
  %v229 = vunpack.c.h.b16 %v62
  %v230 = vunpack.c.l.b16 %v63
  %v231 = vunpack.c.h.b16 %v63
  %v232 = vunpack.c.l.b16 %v64
  %v233 = vunpack.c.h.b16 %v64
  %v234 = vunpack.c.l.b16 %v65
  %v235 = vunpack.c.h.b16 %v65
  %v236 = vunpack.c.l.b16 %v66
  %v237 = vunpack.c.h.b16 %v66
  %v238 = vunpack.c.l.b16 %v67
  %v239 = vunpack.c.h.b16 %v67
  %v240 = vunpack.c.l.b16 %v68
  %v241 = vunpack.c.h.b16 %v68
  %v242 = vunpack.c.l.b16 %v69
  %v243 = vunpack.c.h.b16 %v69
  %v244 = vunpack.c.l.b16 %v70
  %v245 = vunpack.c.h.b16 %v70
  %v246 = vunpack.c.l.b16 %v71
  %v247 = vunpack.c.h.b16 %v71
  %v248 = vunpack.c.l.b16 %v72
  %v249 = vunpack.c.h.b16 %v72
  %v250 = vunpack.c.l.b16 %v73
  %v251 = vunpack.c.h.b16 %v73
  %v252 = vunpack.c.l.b16 %v74
  %v253 = vunpack.c.h.b16 %v74
  %v254 = vunpack.c.l.b16 %v75
  %v255 = vunpack.c.h.b16 %v75
  %v256 = vunpack.c.l.b16 %v76
  %v257 = vunpack.c.h.b16 %v76
  %v258 = vunpack.c.l.b16 %v77
  %v259 = vunpack.c.h.b16 %v77
  %v260 = vunpack.c.l.b16 %v78
  %v261 = vunpack.c.h.b16 %v78
  %v262 = vunpack.c.l.b16 %v79
  %v263 = vunpack.c.h.b16 %v79
  %v264 = vunpack.c.l.b16 %v80
  %v265 = vunpack.c.h.b16 %v80
  %v266 = vunpack.c.l.b16 %v81
  %v267 = vunpack.c.h.b16 %v81
  %v268 = vunpack.c.l.b16 %v82
  %v269 = vunpack.c.h.b16 %v82
  %v270 = vunpack.c.l.b16 %v83
  %v271 = vunpack.c.h.b16 %v83
  %v272 = vunpack.c.l.b16 %v84
  %v273 = vunpack.c.h.b16 %v84
  %v274 = vunpack.c.l.b16 %v85
  %v275 = vunpack.c.h.b16 %v85
  %v276 = vunpack.c.l.b16 %v86
  %v277 = vunpack.c.h.b16 %v86
  %v278 = vunpack.c.l.b16 %v87
  %v279 = vunpack.c.h.b16 %v87
  %v280 = vunpack.c.l.b16 %v88
  %v281 = vunpack.c.h.b16 %v88
  %v282 = vunpack.c.l.b16 %v89
  %v283 = vunpack.c.h.b16 %v89
  %v284 = vunpack.c.l.b16 %v90
  %v285 = vunpack.c.h.b16 %v90
  %v286 = vunpack.c.l.b16 %v91
  %v287 = vunpack.c.h.b16 %v91
  %v288 = vunpack.c.l.b16 %v92
  %v289 = vunpack.c.h.b16 %v92
  %v290 = vunpack.c.l.b16 %v93
  %v291 = vunpack.c.h.b16 %v93
  %v292 = vunpack.c.l.b16 %v94
  %v293 = vunpack.c.h.b16 %v94
  %v294 = vpack.c.b16 %v174, %v166
  %v295 = vpack.c.b16 %v175, %v167
  %v296 = vpack.c.b16 %v176, %v168
  %v297 = vpack.c.b16 %v177, %v169
  %v298 = vpack.c.b16 %v178, %v170
  %v299 = vpack.c.b16 %v179, %v171
  %v300 = vpack.c.b16 %v180, %v172
  %v301 = vpack.c.b16 %v181, %v173
  %v302 = vpack.c.b16 %v190, %v182
  %v303 = vpack.c.b16 %v191, %v183
  %v304 = vpack.c.b16 %v192, %v184
  %v305 = vpack.c.b16 %v193, %v185
  %v306 = vpack.c.b16 %v194, %v186
  %v307 = vpack.c.b16 %v195, %v187
  %v308 = vpack.c.b16 %v196, %v188
  %v309 = vpack.c.b16 %v197, %v189
  %v310 = vpack.c.b16 %v206, %v198
  %v311 = vpack.c.b16 %v207, %v199
  %v312 = vpack.c.b16 %v208, %v200
  %v313 = vpack.c.b16 %v209, %v201
  %v314 = vpack.c.b16 %v210, %v202
  %v315 = vpack.c.b16 %v211, %v203
  %v316 = vpack.c.b16 %v212, %v204
  %v317 = vpack.c.b16 %v213, %v205
  %v318 = vpack.c.b16 %v222, %v214
  %v319 = vpack.c.b16 %v223, %v215
  %v320 = vpack.c.b16 %v224, %v216
  %v321 = vpack.c.b16 %v225, %v217
  %v322 = vpack.c.b16 %v226, %v218
  %v323 = vpack.c.b16 %v227, %v219
  %v324 = vpack.c.b16 %v228, %v220
  %v325 = vpack.c.b16 %v229, %v221
  %v326 = vpack.c.b16 %v238, %v230
  %v327 = vpack.c.b16 %v239, %v231
  %v328 = vpack.c.b16 %v240, %v232
  %v329 = vpack.c.b16 %v241, %v233
  %v330 = vpack.c.b16 %v242, %v234
  %v331 = vpack.c.b16 %v243, %v235
  %v332 = vpack.c.b16 %v244, %v236
  %v333 = vpack.c.b16 %v245, %v237
  %v334 = vpack.c.b16 %v254, %v246
  %v335 = vpack.c.b16 %v255, %v247
  %v336 = vpack.c.b16 %v256, %v248
  %v337 = vpack.c.b16 %v257, %v249
  %v338 = vpack.c.b16 %v258, %v250
  %v339 = vpack.c.b16 %v259, %v251
  %v340 = vpack.c.b16 %v260, %v252
  %v341 = vpack.c.b16 %v261, %v253
  %v342 = vpack.c.b16 %v270, %v262
  %v343 = vpack.c.b16 %v271, %v263
  %v344 = vpack.c.b16 %v272, %v264
  %v345 = vpack.c.b16 %v273, %v265
  %v346 = vpack.c.b16 %v274, %v266
  %v347 = vpack.c.b16 %v275, %v267
  %v348 = vpack.c.b16 %v276, %v268
  %v349 = vpack.c.b16 %v277, %v269
  %v350 = vpack.c.b16 %v286, %v278
  %v351 = vpack.c.b16 %v287, %v279
  %v352 = vpack.c.b16 %v288, %v280
  %v353 = vpack.c.b16 %v289, %v281
  %v354 = vpack.c.b16 %v290, %v282
  %v355 = vpack.c.b16 %v291, %v283
  %v356 = vpack.c.b16 %v292, %v284
  %v357 = vpack.c.b16 %v293, %v285
  %422 = vmatprep.subr.bf16.mxu0 %v351
  %423 = vmatpush1.bf16.xpose.msra.mxu0 %v350
  %424 = vmatprep.subr.bf16.mxu0 %v343
  %425 = vmatpush1.bf16.xpose.msra.mxu0 %v342
  %426 = vmatprep.subr.bf16.mxu0 %v335
  %427 = vmatpush1.bf16.xpose.msra.mxu0 %v334
  %428 = vmatprep.subr.bf16.mxu0 %v327
  %429 = vmatpush1.bf16.xpose.msra.mxu0 %v326
  %430 = vmatprep.subr.bf16.mxu0 %v319
  %431 = vmatpush1.bf16.xpose.msra.mxu0 %v318
  %432 = vmatprep.subr.bf16.mxu0 %v311
  %433 = vmatpush1.bf16.xpose.msra.mxu0 %v310
  %434 = vmatprep.subr.bf16.mxu0 %v303
  %435 = vmatpush1.bf16.xpose.msra.mxu0 %v302
  %436 = vmatprep.subr.bf16.mxu0 %v295
  %437 = vmatpush1.bf16.xpose.msra.mxu0 %v294
  %438 = vmatprep.subr.bf16.mxu0 0
  %439 = vmatpush2.bf16.xpose.msra.mxu0 0
  %440 = vmatprep.subr.bf16.mxu0 0
  %441 = vmatpush2.bf16.xpose.msra.mxu0 0
  %442 = vmatprep.subr.bf16.mxu0 0
  %443 = vmatpush2.bf16.xpose.msra.mxu0 0
  %444 = vmatprep.subr.bf16.mxu0 0
  %445 = vmatpush2.bf16.xpose.msra.mxu0 0
  %446 = vmatprep.subr.bf16.mxu0 0
  %447 = vmatpush2.bf16.xpose.msra.mxu0 0
  %448 = vmatprep.subr.bf16.mxu0 0
  %449 = vmatpush2.bf16.xpose.msra.mxu0 0
  %450 = vmatprep.subr.bf16.mxu0 0
  %451 = vmatpush2.bf16.xpose.msra.mxu0 0
  %452 = vmatprep.subr.bf16.mxu0 0
  %453 = vmatpush2.bf16.xpose.msra.mxu0 0
  %454 = vmatprep.mubr.bf16.mxu0 %v24
  %455 = vmatmul.mubr.bf16.gmra.mxu0 %v23
  %v456 = vpop.f32.mrf.mxu0
  %v457 = vadd.f32 %v100, %v456
  %v458 = vpop.f32.mrf.mxu0
  %v459 = vpop.f32.mrf.mxu0
  %v460 = vpop.f32.mrf.mxu0
  %461 = vdwg.mxu0
  %462 = vmatprep.subr.bf16.mxu0 %v353
  %463 = vmatpush1.bf16.xpose.msra.mxu0 %v352
  %464 = vmatprep.subr.bf16.mxu0 %v345
  %465 = vmatpush1.bf16.xpose.msra.mxu0 %v344
  %466 = vmatprep.subr.bf16.mxu0 %v337
  %467 = vmatpush1.bf16.xpose.msra.mxu0 %v336
  %468 = vmatprep.subr.bf16.mxu0 %v329
  %469 = vmatpush1.bf16.xpose.msra.mxu0 %v328
  %470 = vmatprep.subr.bf16.mxu0 %v321
  %471 = vmatpush1.bf16.xpose.msra.mxu0 %v320
  %472 = vmatprep.subr.bf16.mxu0 %v313
  %473 = vmatpush1.bf16.xpose.msra.mxu0 %v312
  %474 = vmatprep.subr.bf16.mxu0 %v305
  %475 = vmatpush1.bf16.xpose.msra.mxu0 %v304
  %476 = vmatprep.subr.bf16.mxu0 %v297
  %477 = vmatpush1.bf16.xpose.msra.mxu0 %v296
  %478 = vmatprep.subr.bf16.mxu0 0
  %479 = vmatpush2.bf16.xpose.msra.mxu0 0
  %480 = vmatprep.subr.bf16.mxu0 0
  %481 = vmatpush2.bf16.xpose.msra.mxu0 0
  %482 = vmatprep.subr.bf16.mxu0 0
  %483 = vmatpush2.bf16.xpose.msra.mxu0 0
  %484 = vmatprep.subr.bf16.mxu0 0
  %485 = vmatpush2.bf16.xpose.msra.mxu0 0
  %486 = vmatprep.subr.bf16.mxu0 0
  %487 = vmatpush2.bf16.xpose.msra.mxu0 0
  %488 = vmatprep.subr.bf16.mxu0 0
  %489 = vmatpush2.bf16.xpose.msra.mxu0 0
  %490 = vmatprep.subr.bf16.mxu0 0
  %491 = vmatpush2.bf16.xpose.msra.mxu0 0
  %492 = vmatprep.subr.bf16.mxu0 0
  %493 = vmatpush2.bf16.xpose.msra.mxu0 0
  %494 = vmatprep.mubr.bf16.mxu0 %v26
  %495 = vmatmul.mubr.bf16.gmra.mxu0 %v25
  %v496 = vpop.f32.mrf.mxu0
  %v497 = vadd.f32 %v457, %v496
  %v498 = vpop.f32.mrf.mxu0
  %v499 = vpop.f32.mrf.mxu0
  %v500 = vpop.f32.mrf.mxu0
  %501 = vdwg.mxu0
  %502 = vmatprep.subr.bf16.mxu0 %v355
  %503 = vmatpush1.bf16.xpose.msra.mxu0 %v354
  %504 = vmatprep.subr.bf16.mxu0 %v347
  %505 = vmatpush1.bf16.xpose.msra.mxu0 %v346
  %506 = vmatprep.subr.bf16.mxu0 %v339
  %507 = vmatpush1.bf16.xpose.msra.mxu0 %v338
  %508 = vmatprep.subr.bf16.mxu0 %v331
  %509 = vmatpush1.bf16.xpose.msra.mxu0 %v330
  %510 = vmatprep.subr.bf16.mxu0 %v323
  %511 = vmatpush1.bf16.xpose.msra.mxu0 %v322
  %512 = vmatprep.subr.bf16.mxu0 %v315
  %513 = vmatpush1.bf16.xpose.msra.mxu0 %v314
  %514 = vmatprep.subr.bf16.mxu0 %v307
  %515 = vmatpush1.bf16.xpose.msra.mxu0 %v306
  %516 = vmatprep.subr.bf16.mxu0 %v299
  %517 = vmatpush1.bf16.xpose.msra.mxu0 %v298
  %518 = vmatprep.subr.bf16.mxu0 0
  %519 = vmatpush2.bf16.xpose.msra.mxu0 0
  %520 = vmatprep.subr.bf16.mxu0 0
  %521 = vmatpush2.bf16.xpose.msra.mxu0 0
  %522 = vmatprep.subr.bf16.mxu0 0
  %523 = vmatpush2.bf16.xpose.msra.mxu0 0
  %524 = vmatprep.subr.bf16.mxu0 0
  %525 = vmatpush2.bf16.xpose.msra.mxu0 0
  %526 = vmatprep.subr.bf16.mxu0 0
  %527 = vmatpush2.bf16.xpose.msra.mxu0 0
  %528 = vmatprep.subr.bf16.mxu0 0
  %529 = vmatpush2.bf16.xpose.msra.mxu0 0
  %530 = vmatprep.subr.bf16.mxu0 0
  %531 = vmatpush2.bf16.xpose.msra.mxu0 0
  %532 = vmatprep.subr.bf16.mxu0 0
  %533 = vmatpush2.bf16.xpose.msra.mxu0 0
  %534 = vmatprep.mubr.bf16.mxu0 %v28
  %535 = vmatmul.mubr.bf16.gmra.mxu0 %v27
  %v536 = vpop.f32.mrf.mxu0
  %v537 = vadd.f32 %v497, %v536
  %v538 = vpop.f32.mrf.mxu0
  %v539 = vpop.f32.mrf.mxu0
  %v540 = vpop.f32.mrf.mxu0
  %541 = vdwg.mxu0
  %542 = vmatprep.subr.bf16.mxu0 %v357
  %543 = vmatpush1.bf16.xpose.msra.mxu0 %v356
  %544 = vmatprep.subr.bf16.mxu0 %v349
  %545 = vmatpush1.bf16.xpose.msra.mxu0 %v348
  %546 = vmatprep.subr.bf16.mxu0 %v341
  %547 = vmatpush1.bf16.xpose.msra.mxu0 %v340
  %548 = vmatprep.subr.bf16.mxu0 %v333
  %549 = vmatpush1.bf16.xpose.msra.mxu0 %v332
  %550 = vmatprep.subr.bf16.mxu0 %v325
  %551 = vmatpush1.bf16.xpose.msra.mxu0 %v324
  %552 = vmatprep.subr.bf16.mxu0 %v317
  %553 = vmatpush1.bf16.xpose.msra.mxu0 %v316
  %554 = vmatprep.subr.bf16.mxu0 %v309
  %555 = vmatpush1.bf16.xpose.msra.mxu0 %v308
  %556 = vmatprep.subr.bf16.mxu0 %v301
  %557 = vmatpush1.bf16.xpose.msra.mxu0 %v300
  %558 = vmatprep.subr.bf16.mxu0 0
  %559 = vmatpush2.bf16.xpose.msra.mxu0 0
  %560 = vmatprep.subr.bf16.mxu0 0
  %561 = vmatpush2.bf16.xpose.msra.mxu0 0
  %562 = vmatprep.subr.bf16.mxu0 0
  %563 = vmatpush2.bf16.xpose.msra.mxu0 0
  %564 = vmatprep.subr.bf16.mxu0 0
  %565 = vmatpush2.bf16.xpose.msra.mxu0 0
  %566 = vmatprep.subr.bf16.mxu0 0
  %567 = vmatpush2.bf16.xpose.msra.mxu0 0
  %568 = vmatprep.subr.bf16.mxu0 0
  %569 = vmatpush2.bf16.xpose.msra.mxu0 0
  %570 = vmatprep.subr.bf16.mxu0 0
  %571 = vmatpush2.bf16.xpose.msra.mxu0 0
  %572 = vmatprep.subr.bf16.mxu0 0
  %573 = vmatpush2.bf16.xpose.msra.mxu0 0
  %574 = vmatprep.mubr.bf16.mxu0 %v30
  %575 = vmatmul.mubr.bf16.gmra.mxu0 %v29
  %v576 = vpop.f32.mrf.mxu0
  %v577 = vadd.f32 %v537, %v576
  %v578 = vpop.f32.mrf.mxu0
  %v579 = vpop.f32.mrf.mxu0
  %v580 = vpop.f32.mrf.mxu0
  %581 = vdwg.mxu0
  %582 = vst [vmem:[%s3] sm:$0xff] %v577
  // Predicated region
  $region14: #{linear_model_forward.1} parent=0 // pred_check
    _
  $region15: #{linear_model_forward.1} parent=0 // pred_check_branch
    %584 = sbr.rel (0) target = $region17
  $region16: #{linear_model_forward.1} parent=0 // pred_region
    _
  $region17: #{linear_model_forward.1} parent=0 // pred_fallthru
    _
  // Predicated region
  $region18: #{linear_model_forward.1} parent=0 // pred_check
    _
  $region19: #{linear_model_forward.1} parent=0 // pred_check_branch
    %586 = sbr.rel (0) target = $region21
  $region20: #{linear_model_forward.1} parent=0 // pred_region
    _
  $region21: #{linear_model_forward.1} parent=0 // pred_fallthru
    _

</llo_original>
